<compile_context>
chip_gen: v7x
topology: tpu7x:2x2x1
jax: 0.10.0
libtpu: 0.0.40
codegen_flags: <defaults>
</compile_context>

<pallas_src>
import functools
from typing import NamedTuple

import jax
import jax.numpy as jnp
from jax.experimental import pallas as pl
from jax.experimental.pallas import tpu as pltpu

_MiB = 1024 * 1024


def _round_up(a, b):
    return (a + b - 1) // b * b


# -----------------------------------------------------------------------------
# Kernel
# -----------------------------------------------------------------------------
def _cmix_kernel(x_ref, w1_ref, b1_ref, w2_ref, b2_ref, o_ref, acc_ref):
    # x_ref:  (tm, dim)    compute-dtype row tile
    # w1_ref: (dim, th)    compute-dtype chunk of W1^T
    # b1_ref: (1, th)      f32 bias chunk
    # w2_ref: (th, dim)    compute-dtype chunk of W2^T
    # b2_ref: (1, dim)     f32 bias
    # o_ref:  (tm, dim)    output tile (written on last hidden chunk)
    # acc_ref:(tm, dim)    f32 accumulator, resident across the hidden axis
    kh = pl.program_id(1)

    @pl.when(kh == 0)
    def _init():
        # Fold the output bias into the accumulator init: saves a (tm, dim)
        # VPU add + a b2 read in the (store-heavy) finalize step.
        acc_ref[...] = jnp.broadcast_to(b2_ref[...], acc_ref.shape)

    # h_chunk = relu(x @ W1^T[:, chunk] + b1[chunk])  (MXU f32 acc, VPU relu)
    h = jnp.dot(x_ref[...], w1_ref[...], preferred_element_type=jnp.float32)
    h = jnp.maximum(h + b1_ref[...], 0.0)

    # acc += h_chunk @ W2^T[chunk, :]  (cast h to the MXU dtype just before)
    acc_ref[...] += jnp.dot(h.astype(w2_ref.dtype), w2_ref[...],
                            preferred_element_type=jnp.float32)

    @pl.when(kh == pl.num_programs(1) - 1)
    def _finalize():
        o_ref[...] = acc_ref[...].astype(o_ref.dtype)


# -----------------------------------------------------------------------------
# Generation-aware tile / VMEM selection
# -----------------------------------------------------------------------------
@functools.lru_cache(maxsize=1)
def _tpu_info():
    """Returns (scoped VMEM budget bytes, is_v5e, has_two_tensorcores)."""
    kind = ""
    try:
        kind = jax.devices()[0].device_kind.lower()
    except Exception:
        pass
    cap = None
    try:
        cap = int(getattr(pltpu.get_tpu_info(), "vmem_capacity_bytes", 0)) or None
    except Exception:
        cap = None
    if cap is None:
        # v5e/v5p/v6e: 128 MiB VMEM per core; v7x: 64 MiB per TensorCore.
        cap = 128 * _MiB if ("v5" in kind or "v6" in kind) else 64 * _MiB
    is_v5e = ("v5e" in kind) or ("v5 lite" in kind) or ("v5litepod" in kind)
    two_tc = "v7" in kind
    if cap <= 64 * _MiB:
        budget = min(cap - 12 * _MiB, 52 * _MiB)    # v7x-class: leave headroom
    else:
        budget = min(cap - 16 * _MiB, 112 * _MiB)   # v5e / v6e class
    return max(budget, 16 * _MiB), is_v5e, two_tc


def _tm_target(is_v5e, two_tc):
    if two_tc:
        return 512        # v7x: 64 MiB VMEM / TC; ~600 flops/byte crossover
    if is_v5e:
        return 512        # v5e: ~240 flops/byte crossover; 512 gives margin
    return 1024           # v6e-class: ~685 flops/byte crossover, 128 MiB VMEM


def _vmem_est(tm, dim, th, bpe, obpe, w_bufs):
    return (2 * tm * dim * bpe           # x tile (double-buffered)
            + w_bufs * dim * th * bpe    # W1^T chunk
            + w_bufs * th * dim * bpe    # W2^T chunk
            + w_bufs * 8 * th * 4        # b1 chunk (sublane padded)
            + 2 * 8 * dim * 4            # b2
            + 2 * tm * dim * obpe        # output tile
            + tm * dim * 4)              # f32 accumulator


def _pick_tm(dim, th, bpe, obpe, budget, target, w_bufs):
    cands = [c for c in (1024, 768, 512, 384, 256, 128, 64, 32) if c <= target]
    if not cands:
        cands = [32]
    for c in cands:
        if _vmem_est(c, dim, th, bpe, obpe, w_bufs) <= budget:
            return c
    return cands[-1]


# -----------------------------------------------------------------------------
# Parameter prep (one-time: transpose, cast, hidden-pad) and forward
# -----------------------------------------------------------------------------
class CMixParams(NamedTuple):
    w1_t: jax.Array   # (dim, h_pad)  compute dtype
    b1: jax.Array     # (1, h_pad)    f32
    w2_t: jax.Array   # (h_pad, dim)  compute dtype
    b2: jax.Array     # (1, dim)      f32
    hidden: int       # original hidden size
    th: int           # hidden chunk size


def prepare_cmix_params(w1, b1, w2, b2, *, compute_dtype=jnp.bfloat16, th=None):
    """One-time weight prep: pre-transpose, pre-cast and hidden-pad so the
    per-call path does no weight copies in HBM.

    w1: [hidden, dim], b1: [hidden]   (value1 = nn.Linear(dim, hidden))
    w2: [dim, hidden], b2: [dim]      (value2 = nn.Linear(hidden, dim))
    """
    hidden, dim = w1.shape
    th_max = 1024 if th is None else th
    if hidden <= th_max:
        th_eff, h_pad = hidden, hidden               # single full-extent chunk
    else:
        th_eff = max(128, (th_max // 128) * 128)     # lane-aligned chunk
        h_pad = _round_up(hidden, th_eff)

    w1_t = jnp.asarray(w1).T.astype(compute_dtype)   # (dim, hidden)
    w2_t = jnp.asarray(w2).T.astype(compute_dtype)   # (hidden, dim)
    b1_2d = jnp.asarray(b1).astype(jnp.float32).reshape(1, hidden)
    if h_pad != hidden:
        w1_t = jnp.pad(w1_t, ((0, 0), (0, h_pad - hidden)))
        w2_t = jnp.pad(w2_t, ((0, h_pad - hidden), (0, 0)))
        b1_2d = jnp.pad(b1_2d, ((0, 0), (0, h_pad - hidden)))
    b2_2d = jnp.asarray(b2).astype(jnp.float32).reshape(1, dim)
    return CMixParams(w1_t, b1_2d, w2_t, b2_2d, hidden=int(hidden), th=int(th_eff))


def cmix_forward(x, params: CMixParams, *, tm=None):
    """CMix forward: value2(relu(value1(x))) with pre-prepared weights.

    x: [B, T, dim] (any float dtype; cast to the compute dtype on the fly).
    """
    B, T, dim = x.shape
    M = B * T
    out_dtype = x.dtype
    compute_dtype = params.w1_t.dtype
    bpe = jnp.dtype(compute_dtype).itemsize
    obpe = jnp.dtype(out_dtype).itemsize
    sub = 16 if bpe == 2 else 8

    h_pad = params.w1_t.shape[1]
    th_eff = params.th
    n_h = h_pad // th_eff

    budget, is_v5e, two_tc = _tpu_info()
    # v5e's lower HBM BW benefits from 3-deep weight-chunk buffering when the
    # hidden axis actually has several chunks to pipeline over.
    w_bufs = 3 if (is_v5e and n_h > 2) else 2

    if tm is None:
        tm = _pick_tm(dim, th_eff, bpe, obpe, budget,
                      _tm_target(is_v5e, two_tc), w_bufs)

    # ---- row tiling: avoid padded copies of x when possible ------------------
    if M <= tm:
        tm_eff, m_pad = M, M                         # single full-extent tile
    else:
        tm_eff = max(sub, (min(tm, M) // sub) * sub)
        if M % tm_eff == 0:
            m_pad = M
        else:
            # prefer a sublane-aligned divisor of M (no padded x copy) within
            # [tm/2, tm]; otherwise pad rows.
            found = None
            c = tm_eff
            while c >= max(sub, tm_eff // 2):
                if M % c == 0:
                    found = c
                    break
                c -= sub
            if found is not None:
                tm_eff, m_pad = found, M
            else:
                m_pad = _round_up(M, tm_eff)
    # v7x (2 TensorCores/chip): ensure the "parallel" row axis has >= 2 tiles.
    if two_tc and m_pad // tm_eff == 1 and M >= 2 * sub:
        tm_eff = _round_up(-(-M // 2), sub)
        m_pad = _round_up(M, tm_eff)

    # ---- activations (cast / pad only when needed) ----------------------------
    # TODO(synk): fusing the compute-dtype cast into x's producer would save one
    # extra HBM pass over the activations for f32 inputs.
    x2d = x.reshape(M, dim)
    if x2d.dtype != compute_dtype:
        x2d = x2d.astype(compute_dtype)
    if m_pad != M:
        x2d = jnp.pad(x2d, ((0, m_pad - M), (0, 0)))

    grid = (m_pad // tm_eff, n_h)
    n_row_tiles = grid[0]

    # ---- VMEM budget / cost hints ---------------------------------------------
    vmem_est = _vmem_est(tm_eff, dim, th_eff, bpe, obpe, w_bufs)
    vmem_limit = int(min(max(int(1.25 * vmem_est) + 2 * _MiB, 16 * _MiB),
                         128 * _MiB))
    cost = pl.CostEstimate(
        flops=4 * M * dim * params.hidden,
        transcendentals=0,
        bytes_accessed=(m_pad * dim * bpe                       # x in
                        + n_row_tiles * 2 * dim * h_pad * bpe   # weights, re-read per row tile
                        + n_row_tiles * 4 * (h_pad + dim)       # biases
                        + m_pad * dim * obpe),                  # out
    )

    if w_bufs == 3:
        w1_spec = pl.BlockSpec((dim, th_eff), lambda i, k: (0, k),
                               pipeline_mode=pl.Buffered(3))
        w2_spec = pl.BlockSpec((th_eff, dim), lambda i, k: (k, 0),
                               pipeline_mode=pl.Buffered(3))
    else:
        w1_spec = pl.BlockSpec((dim, th_eff), lambda i, k: (0, k))
        w2_spec = pl.BlockSpec((th_eff, dim), lambda i, k: (k, 0))

    out = pl.pallas_call(
        _cmix_kernel,
        out_shape=jax.ShapeDtypeStruct((m_pad, dim), out_dtype),
        grid_spec=pltpu.PrefetchScalarGridSpec(
            num_scalar_prefetch=0,
            grid=grid,
            in_specs=[
                pl.BlockSpec((tm_eff, dim), lambda i, k: (i, 0)),   # x rows
                w1_spec,                                            # W1^T chunk
                pl.BlockSpec((1, th_eff), lambda i, k: (0, k)),     # b1 chunk
                w2_spec,                                            # W2^T chunk
                pl.BlockSpec((1, dim), lambda i, k: (0, 0)),        # b2
            ],
            out_specs=pl.BlockSpec((tm_eff, dim), lambda i, k: (i, 0)),
            scratch_shapes=[pltpu.VMEM((tm_eff, dim), jnp.float32)],
        ),
        compiler_params=pltpu.CompilerParams(
            dimension_semantics=("parallel", "arbitrary"),
            vmem_limit_bytes=vmem_limit,
        ),
        cost_estimate=cost,
    )(x2d, params.w1_t, params.b1, params.w2_t, params.b2)

    if m_pad != M:
        out = out[:M]
    return out.reshape(B, T, dim)


# -----------------------------------------------------------------------------
# Test scaffolding
# -----------------------------------------------------------------------------
def init_cmix_params(key, dim, hidden_dim, dtype=jnp.float32):
    """Deterministic init mimicking nn.Linear defaults (uniform +-1/sqrt(fan_in))."""
    k1, k2, k3, k4 = jax.random.split(key, 4)
    bound1 = 1.0 / (dim ** 0.5)
    bound2 = 1.0 / (hidden_dim ** 0.5)
    w1 = jax.random.uniform(k1, (hidden_dim, dim), dtype, -bound1, bound1)
    b1 = jax.random.uniform(k2, (hidden_dim,), dtype, -bound1, bound1)
    w2 = jax.random.uniform(k3, (dim, hidden_dim), dtype, -bound2, bound2)
    b2 = jax.random.uniform(k4, (dim,), dtype, -bound2, bound2)
    return w1, b1, w2, b2


def _reference(x, w1, b1, w2, b2, compute_dtype=jnp.bfloat16):
    """Pure-JAX reference with the same precision recipe as the kernel."""
    xd = x.astype(compute_dtype).astype(jnp.float32)
    w1d = w1.astype(compute_dtype).astype(jnp.float32)
    w2d = w2.astype(compute_dtype).astype(jnp.float32)
    h = jnp.maximum(xd @ w1d.T + b1.astype(jnp.float32), 0.0)
    h = h.astype(compute_dtype).astype(jnp.float32)
    return (h @ w2d.T + b2.astype(jnp.float32)).astype(x.dtype)


def _check(x, raw_params, params, **fwd_kw):
    y = jax.block_until_ready(cmix_forward(x, params, **fwd_kw))
    y_ref = _reference(x, *raw_params)
    assert y.shape == x.shape
    assert jnp.allclose(y, y_ref, atol=1e-2, rtol=1e-2), (
        f"mismatch: max abs diff {jnp.max(jnp.abs(y - y_ref))}")
    return y


if __name__ == "__main__":
    key = jax.random.PRNGKey(0)
    kx, kp, kx2, kp2, kx3 = jax.random.split(key, 5)

    # 1) Small CMix-like shape (block_id / n_blocks unused in forward).
    B, T, dim, hidden_dim = 2, 8, 32, 64
    x = jax.random.normal(kx, (B, T, dim), jnp.float32)
    raw = init_cmix_params(kp, dim, hidden_dim)
    params = prepare_cmix_params(*raw)              # one-time weight prep
    _check(x, raw, params)

    # 2) Hidden-chunk accumulation path (hidden > th -> 2 chunks) and a row
    #    count that is not a power of two.
    dim2, hidden2 = 32, 256
    x2 = jax.random.normal(kx2, (1, 23, dim2), jnp.float32)
    raw2 = init_cmix_params(kp2, dim2, hidden2)
    params2 = prepare_cmix_params(*raw2, th=128)
    _check(x2, raw2, params2)

    # 3) Multiple row tiles + row padding (M=40 with tm=16 -> padded to 48).
    x3 = jax.random.normal(kx3, (1, 40, dim), jnp.float32)
    _check(x3, raw, params, tm=16)

    print("KERNEL_OK")
</pallas_src>

<mosaic_0001>
module attributes {stable_mosaic.version = 11 : i64} {
  func.func @_cmix_kernel(%arg0: i32, %arg1: i32, %arg2: memref<16x32xbf16, #tpu.memory_space<vmem>>, %arg3: memref<32x64xbf16, #tpu.memory_space<vmem>>, %arg4: memref<1x64xf32, #tpu.memory_space<vmem>>, %arg5: memref<64x32xbf16, #tpu.memory_space<vmem>>, %arg6: memref<1x32xf32, #tpu.memory_space<vmem>>, %arg7: memref<16x32xf32, #tpu.memory_space<vmem>>, %arg8: memref<16x32xf32, #tpu.memory_space<vmem>>) attributes {dimension_semantics = [#tpu.dimension_semantics<parallel>, #tpu.dimension_semantics<arbitrary>], iteration_bounds = array<i64: 1, 1>, scalar_prefetch = 0 : i64, scratch_operands = 1 : i64, tpu.core_type = #tpu.core_type<tc>, window_params = [{transform_indices = @transform_0, window_bounds = array<i64: 16, 32>}, {transform_indices = @transform_1, window_bounds = array<i64: 32, 64>}, {transform_indices = @transform_2, window_bounds = array<i64: 1, 64>}, {transform_indices = @transform_3, window_bounds = array<i64: 64, 32>}, {pipeline_mode = #tpu.pipeline_mode<synchronous>, transform_indices = @transform_4, window_bounds = array<i64: 1, 32>}, {transform_indices = @transform_5, window_bounds = array<i64: 16, 32>}]} {
    %c0_i32 = arith.constant 0 : i32
    %0 = arith.cmpi eq, %arg1, %c0_i32 : i32
    %1 = arith.extui %0 : i1 to i32
    %c0_i32_0 = arith.constant 0 : i32
    %2 = arith.cmpi ne, %1, %c0_i32_0 : i32
    scf.if %2 {
      %c0_16 = arith.constant 0 : index
      %c0_17 = arith.constant 0 : index
      %20 = vector.load %arg6[%c0_16, %c0_17] : memref<1x32xf32, #tpu.memory_space<vmem>>, vector<1x32xf32>
      %21 = vector.shape_cast %20 : vector<1x32xf32> to vector<1x32xf32>
      %22 = vector.broadcast %21 : vector<1x32xf32> to vector<16x32xf32>
      %c0_18 = arith.constant 0 : index
      %c0_19 = arith.constant 0 : index
      %23 = vector.load %arg8[%c0_18, %c0_19] : memref<16x32xf32, #tpu.memory_space<vmem>>, vector<16x32xf32>
      tpu.vector_store %arg8[%c0_18, %c0_19], %22 {strides = array<i32>} : memref<16x32xf32, #tpu.memory_space<vmem>>, vector<16x32xf32>,
    } else {
    }
    %c0 = arith.constant 0 : index
    %c0_1 = arith.constant 0 : index
    %3 = vector.load %arg2[%c0, %c0_1] : memref<16x32xbf16, #tpu.memory_space<vmem>>, vector<16x32xbf16>
    %c0_2 = arith.constant 0 : index
    %c0_3 = arith.constant 0 : index
    %4 = vector.load %arg3[%c0_2, %c0_3] : memref<32x64xbf16, #tpu.memory_space<vmem>>, vector<32x64xbf16>
    %cst = arith.constant dense<0.000000e+00> : vector<16x64xf32>
    %5 = tpu.matmul %3, %4, %cst {dimension_numbers = #tpu.dot_dimension_numbers<[1], [0], [0], [1], [0, 0, 1, 1], [], []>} : vector<16x32xbf16>, vector<32x64xbf16>, vector<16x64xf32> -> vector<16x64xf32>
    %c0_4 = arith.constant 0 : index
    %c0_5 = arith.constant 0 : index
    %6 = vector.load %arg4[%c0_4, %c0_5] : memref<1x64xf32, #tpu.memory_space<vmem>>, vector<1x64xf32>
    %7 = vector.broadcast %6 : vector<1x64xf32> to vector<16x64xf32>
    %8 = arith.addf %5, %7 : vector<16x64xf32>
    %cst_6 = arith.constant 0.000000e+00 : f32
    %9 = vector.broadcast %cst_6 : f32 to vector<16x64xf32>
    %10 = arith.maximumf %8, %9 : vector<16x64xf32>
    %c0_7 = arith.constant 0 : index
    %c0_8 = arith.constant 0 : index
    %11 = vector.load %arg8[%c0_7, %c0_8] : memref<16x32xf32, #tpu.memory_space<vmem>>, vector<16x32xf32>
    %12 = arith.truncf %10 : vector<16x64xf32> to vector<16x64xbf16>
    %c0_9 = arith.constant 0 : index
    %c0_10 = arith.constant 0 : index
    %13 = vector.load %arg5[%c0_9, %c0_10] : memref<64x32xbf16, #tpu.memory_space<vmem>>, vector<64x32xbf16>
    %cst_11 = arith.constant dense<0.000000e+00> : vector<16x32xf32>
    %14 = tpu.matmul %12, %13, %cst_11 {dimension_numbers = #tpu.dot_dimension_numbers<[1], [0], [0], [1], [0, 0, 1, 1], [], []>} : vector<16x64xbf16>, vector<64x32xbf16>, vector<16x32xf32> -> vector<16x32xf32>
    %15 = arith.addf %11, %14 : vector<16x32xf32>
    %c0_12 = arith.constant 0 : index
    %c0_13 = arith.constant 0 : index
    %16 = vector.load %arg8[%c0_12, %c0_13] : memref<16x32xf32, #tpu.memory_space<vmem>>, vector<16x32xf32>
    tpu.vector_store %arg8[%c0_12, %c0_13], %15 {strides = array<i32>} : memref<16x32xf32, #tpu.memory_space<vmem>>, vector<16x32xf32>,
    %c0_i32_14 = arith.constant 0 : i32
    %17 = arith.cmpi eq, %arg1, %c0_i32_14 : i32
    %18 = arith.extui %17 : i1 to i32
    %c0_i32_15 = arith.constant 0 : i32
    %19 = arith.cmpi ne, %18, %c0_i32_15 : i32
    scf.if %19 {
      %c0_16 = arith.constant 0 : index
      %c0_17 = arith.constant 0 : index
      %20 = vector.load %arg8[%c0_16, %c0_17] : memref<16x32xf32, #tpu.memory_space<vmem>>, vector<16x32xf32>
      %c0_18 = arith.constant 0 : index
      %c0_19 = arith.constant 0 : index
      %21 = vector.load %arg7[%c0_18, %c0_19] : memref<16x32xf32, #tpu.memory_space<vmem>>, vector<16x32xf32>
      tpu.vector_store %arg7[%c0_18, %c0_19], %20 {strides = array<i32>} : memref<16x32xf32, #tpu.memory_space<vmem>>, vector<16x32xf32>,
    } else {
    }
    return
  }
  func.func @transform_0(%arg0: i32, %arg1: i32) -> (i32, i32) {
    %c0_i32 = arith.constant 0 : i32
    %c0_i32_0 = arith.constant 0 : i32
    return %arg0, %c0_i32 : i32, i32
  }
  func.func @transform_1(%arg0: i32, %arg1: i32) -> (i32, i32) {
    %c0_i32 = arith.constant 0 : i32
    %c0_i32_0 = arith.constant 0 : i32
    return %c0_i32, %arg1 : i32, i32
  }
  func.func @transform_2(%arg0: i32, %arg1: i32) -> (i32, i32) {
    %c0_i32 = arith.constant 0 : i32
    %c0_i32_0 = arith.constant 0 : i32
    return %c0_i32, %arg1 : i32, i32
  }
  func.func @transform_3(%arg0: i32, %arg1: i32) -> (i32, i32) {
    %c0_i32 = arith.constant 0 : i32
    %c0_i32_0 = arith.constant 0 : i32
    return %arg1, %c0_i32 : i32, i32
  }
  func.func @transform_4(%arg0: i32, %arg1: i32) -> (i32, i32) {
    %c0_i32 = arith.constant 0 : i32
    %c0_i32_0 = arith.constant 0 : i32
    %c0_i32_1 = arith.constant 0 : i32
    return %c0_i32, %c0_i32_0 : i32, i32
  }
  func.func @transform_5(%arg0: i32, %arg1: i32) -> (i32, i32) {
    %c0_i32 = arith.constant 0 : i32
    %c0_i32_0 = arith.constant 0 : i32
    return %arg0, %c0_i32 : i32, i32
  }
}

</mosaic_0001>

<llo_original>
// kernel: tpu_custom_call.1
$region0: #{tpu_custom_call.1}
  #allocation0 [shape = 'u32[]', space=smem, size = 0x4, offset = 0x4, fixed_abs, tag = 'smem constant byte address 0x4 - core index']
  #allocation1 [shape = 'u32[144,128]{1,0:T(1,128)}', space=vmem, size = 0x12000, scoped, tag = 'internal scratch']
  #allocation2 [shape = 'f32[16,32]{1,0:T(8,128)}', space=vmem, size = 0x2000, scoped, tag = 'scratch operand']
  %s0 = inlined_call_operand.vmem [shape: bf16[16,32], index: 0, kind: input, shape index: {}]
  %s1 = inlined_call_operand.vmem [shape: bf16[32,64], index: 1, kind: input, shape index: {}]
  %s2 = inlined_call_operand.vmem [shape: f32[1,64], index: 2, kind: input, shape index: {}]
  %s3 = inlined_call_operand.vmem [shape: bf16[64,32], index: 3, kind: input, shape index: {}]
  %s4 = inlined_call_operand.vmem [shape: f32[1,32], index: 4, kind: input, shape index: {}]
  %s5 = inlined_call_operand.hbm [shape: f32[16,32], index: 5, kind: output, shape index: {}]
  %s6 = sld [smem:[#allocation0]]
  $region38: #{tpu_custom_call.1} parent=0
    _
  %s8 = ssub.s32 1, %s6
  %s9 = scalar_select 0, %s8, %s6
  $region1: #{tpu_custom_call.1} parent=0
    #allocation3 [shape = 'u8[8192]{0}', space=vmem, size = 0x2000, scoped, tag = 'output window, operand 0, single buffered']
    #allocation4 [shape = 's32[1]{0}', space=sflag, size = 0x4, scoped, tag = 'scoped memory for tpu_custom_call.1']
    %10 = vsyncpa [#allocation4], 0
    // Predicated region
    $region2: #{tpu_custom_call.1} parent=1 // pred_check
      _
    $region3: #{tpu_custom_call.1} parent=1 // pred_check_branch
      %12 = sbr.rel (0) target = $region5
    $region4: #{tpu_custom_call.1} parent=1 // pred_region
      _
    $region5: #{tpu_custom_call.1} parent=1 // pred_fallthru
      _
    // Predicated region
    $region6: #{tpu_custom_call.1} parent=1 // pred_check
      _
    $region7: #{tpu_custom_call.1} parent=1 // pred_check_branch
      %14 = sbr.rel (0) target = $region9
    $region8: #{tpu_custom_call.1} parent=1 // pred_region
      _
    $region9: #{tpu_custom_call.1} parent=1 // pred_fallthru
      _
    // Predicated region
    $region10: #{tpu_custom_call.1} parent=1 // pred_check
      _
    $region11: #{tpu_custom_call.1} parent=1 // pred_check_branch
      %16 = sbr.rel (0) target = $region13
    $region12: #{tpu_custom_call.1} parent=1 // pred_region
      _
    $region13: #{tpu_custom_call.1} parent=1 // pred_fallthru
      _
    // Predicated region
    $region14: #{tpu_custom_call.1} parent=1 // pred_check
      _
    $region15: #{tpu_custom_call.1} parent=1 // pred_check_branch
      %18 = sbr.rel (0) target = $region17
    $region16: #{tpu_custom_call.1} parent=1 // pred_region
      _
    $region17: #{tpu_custom_call.1} parent=1 // pred_fallthru
      _
    // Predicated region
    $region18: #{tpu_custom_call.1} parent=1 // pred_check
      _
    $region19: #{tpu_custom_call.1} parent=1 // pred_check_branch
      %20 = sbr.rel (0) target = $region21
    $region20: #{tpu_custom_call.1} parent=1 // pred_region
      _
    $region21: #{tpu_custom_call.1} parent=1 // pred_fallthru
      _
    %p22 = scmp.eq.s32.totalorder 0, 0
    // Predicated region
    $region22: #{tpu_custom_call.1} parent=1 // pred_check
      %p23 = pneg %p22
    $region23: #{tpu_custom_call.1} parent=1 // pred_check_branch
      %25 = sbr.rel (%p23) target = $region25
    $region24: #{tpu_custom_call.1} parent=1 // pred_region
      %v26 = vld [vmem:[%s4] sm:$0x1]
      %v28 = vlaneseq
      %v29 = vshrl.u32 %v28, 7
      %v30 = vsub.s32 0, %v29
      %v31 = vrot.slane %v26, %v30
      %vm33 = vcmask 261120
      %34 = vst.msk [vmem:[#allocation2] sm:$0xff] %vm33, %v31
      %35 = vst.msk [vmem:[#allocation2 + $0x8] sm:$0xff] %vm33, %v31
    $region25: #{tpu_custom_call.1} parent=1 // pred_fallthru
      _
    %v36 = vld [vmem:[%s0] sm:$0xf]
    %v37 = vld [vmem:[%s0 + $0x4] sm:$0xf]
    %v38 = vld [vmem:[%s1] sm:$0xf]
    %v39 = vld [vmem:[%s1 + $0x4] sm:$0xf]
    %v40 = vld [vmem:[%s1 + $0x8] sm:$0xf]
    %v41 = vld [vmem:[%s1 + $0xc] sm:$0xf]
    %v42 = vld [vmem:[%s2] sm:$0x1]
    %v44 = vlaneseq
    %v45 = vshrl.u32 %v44, 7
    %v46 = vsub.s32 0, %v45
    %v47 = vrot.slane %v42, %v46
    %v51 = vunpack.c.l.b16 %v36
    %v52 = vunpack.c.l.b16 %v37
    %v53 = vpack.c.b16 %v52, %v51
    %v58 = vunpack.c.l.b16 %v38
    %v59 = vunpack.c.l.b16 %v39
    %v60 = vunpack.c.l.b16 %v40
    %v61 = vunpack.c.l.b16 %v41
    %v62 = vpack.c.b16 %v59, %v58
    %v63 = vpack.c.b16 %v61, %v60
    %vm66 = vcmask 261120
    %v68 = vsel %vm66, %v53, 0
    %70 = vmatprep.subr.bf16.mxu0 0
    %71 = vmatpush1.bf16.msra.mxu0 %v62
    %72 = vmatprep.subr.bf16.mxu0 0
    %73 = vmatpush1.bf16.msra.mxu0 %v63
    %74 = vmatprep.subr.bf16.mxu0 0
    %75 = vmatpush1.bf16.msra.mxu0 0
    %76 = vmatprep.subr.bf16.mxu0 0
    %77 = vmatpush1.bf16.msra.mxu0 0
    %78 = vmatprep.subr.bf16.mxu0 0
    %79 = vmatpush1.bf16.msra.mxu0 0
    %80 = vmatprep.subr.bf16.mxu0 0
    %81 = vmatpush1.bf16.msra.mxu0 0
    %82 = vmatprep.subr.bf16.mxu0 0
    %83 = vmatpush1.bf16.msra.mxu0 0
    %84 = vmatprep.subr.bf16.mxu0 0
    %85 = vmatpush1.bf16.msra.mxu0 0
    %86 = vmatprep.subr.bf16.mxu0 0
    %87 = vmatpush1.bf16.msra.mxu0 0
    %88 = vmatprep.subr.bf16.mxu0 0
    %89 = vmatpush1.bf16.msra.mxu0 0
    %90 = vmatprep.subr.bf16.mxu0 0
    %91 = vmatpush1.bf16.msra.mxu0 0
    %92 = vmatprep.subr.bf16.mxu0 0
    %93 = vmatpush1.bf16.msra.mxu0 0
    %94 = vmatprep.subr.bf16.mxu0 0
    %95 = vmatpush1.bf16.msra.mxu0 0
    %96 = vmatprep.subr.bf16.mxu0 0
    %97 = vmatpush1.bf16.msra.mxu0 0
    %98 = vmatprep.subr.bf16.mxu0 0
    %99 = vmatpush1.bf16.msra.mxu0 0
    %100 = vmatprep.subr.bf16.mxu0 0
    %101 = vmatpush1.bf16.msra.mxu0 0
    %102 = vmatprep.mubr.bf16.mxu0 0
    %103 = vmatmul.mubr.bf16.gmra.mrb[0].mxu0 %v68
    %v104 = vpop.f32.mrb[0].mxu0
    %v105 = vadd.f32 %v47, %v104
    %v106 = vpop.f32.mrb[0].mxu0
    %v107 = vpop.f32.mrb[0].mxu0
    %v108 = vadd.f32 %v47, %v107
    %v109 = vpop.f32.mrb[0].mxu0
    %110 = vdwg.mxu0
    %v111 = vmax.f32 %v105, 0.0
    %v112 = vmax.f32 %v108, 0.0
    %v113 = vld [vmem:[#allocation2] sm:$0xff]
    %v114 = vld [vmem:[#allocation2 + $0x8] sm:$0xff]
    %v115 = vpack.c.bf16 %v112, %v111
    %v116 = vld [vmem:[%s3] sm:$0xf]
    %v117 = vld [vmem:[%s3 + $0x4] sm:$0xf]
    %v118 = vld [vmem:[%s3 + $0x8] sm:$0xf]
    %v119 = vld [vmem:[%s3 + $0xc] sm:$0xf]
    %v120 = vld [vmem:[%s3 + $0x10] sm:$0xf]
    %v121 = vld [vmem:[%s3 + $0x14] sm:$0xf]
    %v122 = vld [vmem:[%s3 + $0x18] sm:$0xf]
    %v123 = vld [vmem:[%s3 + $0x1c] sm:$0xf]
    %v132 = vunpack.c.l.b16 %v116
    %v133 = vunpack.c.l.b16 %v117
    %v134 = vunpack.c.l.b16 %v118
    %v135 = vunpack.c.l.b16 %v119
    %v136 = vunpack.c.l.b16 %v120
    %v137 = vunpack.c.l.b16 %v121
    %v138 = vunpack.c.l.b16 %v122
    %v139 = vunpack.c.l.b16 %v123
    %v140 = vpack.c.b16 %v133, %v132
    %v141 = vpack.c.b16 %v135, %v134
    %v142 = vpack.c.b16 %v137, %v136
    %v143 = vpack.c.b16 %v139, %v138
    %vm148 = vcmask 523264
    %v150 = vsel %vm148, %v115, 0
    %152 = vmatprep.subr.bf16.mxu0 0
    %153 = vmatpush1.bf16.msra.mxu0 %v140
    %154 = vmatprep.subr.bf16.mxu0 0
    %155 = vmatpush1.bf16.msra.mxu0 %v141
    %156 = vmatprep.subr.bf16.mxu0 0
    %157 = vmatpush1.bf16.msra.mxu0 %v142
    %158 = vmatprep.subr.bf16.mxu0 0
    %159 = vmatpush1.bf16.msra.mxu0 %v143
    %160 = vmatprep.subr.bf16.mxu0 0
    %161 = vmatpush1.bf16.msra.mxu0 0
    %162 = vmatprep.subr.bf16.mxu0 0
    %163 = vmatpush1.bf16.msra.mxu0 0
    %164 = vmatprep.subr.bf16.mxu0 0
    %165 = vmatpush1.bf16.msra.mxu0 0
    %166 = vmatprep.subr.bf16.mxu0 0
    %167 = vmatpush1.bf16.msra.mxu0 0
    %168 = vmatprep.subr.bf16.mxu0 0
    %169 = vmatpush1.bf16.msra.mxu0 0
    %170 = vmatprep.subr.bf16.mxu0 0
    %171 = vmatpush1.bf16.msra.mxu0 0
    %172 = vmatprep.subr.bf16.mxu0 0
    %173 = vmatpush1.bf16.msra.mxu0 0
    %174 = vmatprep.subr.bf16.mxu0 0
    %175 = vmatpush1.bf16.msra.mxu0 0
    %176 = vmatprep.subr.bf16.mxu0 0
    %177 = vmatpush1.bf16.msra.mxu0 0
    %178 = vmatprep.subr.bf16.mxu0 0
    %179 = vmatpush1.bf16.msra.mxu0 0
    %180 = vmatprep.subr.bf16.mxu0 0
    %181 = vmatpush1.bf16.msra.mxu0 0
    %182 = vmatprep.subr.bf16.mxu0 0
    %183 = vmatpush1.bf16.msra.mxu0 0
    %184 = vmatprep.mubr.bf16.mxu0 0
    %185 = vmatmul.mubr.bf16.gmra.mrb[0].mxu0 %v150
    %v186 = vpop.f32.mrb[0].mxu0
    %v187 = vadd.f32 0.0, %v186
    %v188 = vpop.f32.mrb[0].mxu0
    %v189 = vpop.f32.mrb[0].mxu0
    %v190 = vadd.f32 0.0, %v189
    %v191 = vpop.f32.mrb[0].mxu0
    %192 = vdwg.mxu0
    %v193 = vadd.f32 %v113, %v187
    %v194 = vadd.f32 %v114, %v190
    %195 = vst.msk [vmem:[#allocation2] sm:$0xff] %vm66, %v193
    %196 = vst.msk [vmem:[#allocation2 + $0x8] sm:$0xff] %vm66, %v194
    // Predicated region
    $region26: #{tpu_custom_call.1} parent=1 // pred_check
      %p197 = pneg %p22
    $region27: #{tpu_custom_call.1} parent=1 // pred_check_branch
      %199 = sbr.rel (%p197) target = $region29
    $region28: #{tpu_custom_call.1} parent=1 // pred_region
      %v200 = vld [vmem:[#allocation2] sm:$0xff]
      %v201 = vld [vmem:[#allocation2 + $0x8] sm:$0xff]
      %202 = vst.msk [vmem:[#allocation3] sm:$0xff] %vm66, %v200
      %203 = vst.msk [vmem:[#allocation3 + $0x8] sm:$0xff] %vm66, %v201
    $region29: #{tpu_custom_call.1} parent=1 // pred_fallthru
      _
    // Predicated region
    $region30: #{tpu_custom_call.1} parent=1 // pred_check
      _
    $region31: #{tpu_custom_call.1} parent=1 // pred_check_branch
      %205 = sbr.rel (0) target = $region33
    $region32: #{tpu_custom_call.1} parent=1 // pred_region
      %s207 = ssub.s32 256, 256
      %208 = vsyncadd [#allocation4], %s207
      %s209 = sshll.u32 [#allocation3], 4
      %s210 = int_to_ptr.vmem [resolvable:$true] %s209
      %215 = dma.vmem_to_hbm [thread:$0]  %s210, 256, %s5, [#allocation4], 128, 128, 8
    $region33: #{tpu_custom_call.1} parent=1 // pred_fallthru
      _
    // Predicated region
    $region34: #{tpu_custom_call.1} parent=1 // pred_check
      _
    $region35: #{tpu_custom_call.1} parent=1 // pred_check_branch
      %217 = sbr.rel (0) target = $region37
    $region36: #{tpu_custom_call.1} parent=1 // pred_region
      %218 = dma.done [#allocation4], 256
    $region37: #{tpu_custom_call.1} parent=1 // pred_fallthru
      _
    %219 = vsyncpa [#allocation4], 1

</llo_original>
